<compile_context>
chip_gen: v7x
topology: tpu7x:2x2x1
jax: 0.10.0
libtpu: 0.0.40
codegen_flags: <defaults>
</compile_context>

<pallas_src>
import jax
import jax.numpy as jnp
from jax import lax
from jax.experimental import pallas as pl
from jax.experimental.pallas import tpu as pltpu

LANES = 128


def _make_rmse_partial_kernel(tm: int, total_rows: int, needs_mask: bool):
    """Per-block partial sum-of-squared-differences.

    Each grid step reads one (tm, LANES) tile of predictions/targets (native
    dtype), upcasts to f32, squares the difference, optionally masks rows that
    fall beyond the real data (last ragged block), and writes an (8, LANES)
    lane-parallel partial sum. There is no cross-step state, so every grid
    step is independent ("parallel").
    """

    def kernel(p_ref, t_ref, o_ref):
        d = p_ref[...].astype(jnp.float32) - t_ref[...].astype(jnp.float32)
        d2 = d * d
        if needs_mask:
            i = pl.program_id(0)
            valid_rows = total_rows - i * tm  # rows of this block that are real
            row_ids = lax.broadcasted_iota(jnp.int32, (tm, LANES), 0)
            d2 = jnp.where(row_ids < valid_rows, d2, 0.0)
        # Sublane-group reduce to an (8, LANES) partial; keeps the lane axis
        # intact (cross-lane reduce deferred to the epilogue).
        partial = d2.reshape(tm // 8, 8, LANES).sum(axis=0)
        o_ref[...] = partial[None, :, :]

    return kernel


def _round_up(x: int, m: int) -> int:
    return ((x + m - 1) // m) * m


def rmse_pallas(predictions: jax.Array, targets: jax.Array, *, tm: int = 2048) -> jax.Array:
    """Computes sqrt(mean((predictions - targets)**2)) — matches torch Rmse."""
    assert predictions.shape == targets.shape, "shapes must match (no broadcasting)"
    total = predictions.size
    assert total > 0

    # Sublane-packing requirement for the second-minor block dim:
    # 8 rows for 32-bit dtypes, 16 for 16-bit, 32 for 8-bit.
    def sublane_req(x):
        return 8 * max(1, 4 // jnp.dtype(x.dtype).itemsize)

    sub = max(sublane_req(predictions), sublane_req(targets))
    assert tm % sub == 0, f"tm={tm} must be a multiple of {sub} for these dtypes"

    # Flatten in native dtype. Zero padding (only when needed) contributes
    # (0 - 0)^2 = 0 to the sum; the mean divides by the true element count.
    pad_to = sub * LANES
    padded_total = _round_up(total, pad_to)

    def to_slab(x):
        flat = x.reshape(-1)
        if padded_total != total:
            flat = jnp.pad(flat, (0, padded_total - total))
        return flat.reshape(padded_total // LANES, LANES)

    p2 = to_slab(predictions)
    t2 = to_slab(targets)
    rows = p2.shape[0]  # multiple of `sub`

    tm_eff = min(tm, rows)            # rows is a multiple of `sub`, so tm_eff is too
    n_blocks = pl.cdiv(rows, tm_eff)
    needs_mask = (rows % tm_eff) != 0  # last block partially out-of-bounds in rows

    partials = pl.pallas_call(
        _make_rmse_partial_kernel(tm_eff, rows, needs_mask),
        out_shape=jax.ShapeDtypeStruct((n_blocks, 8, LANES), jnp.float32),
        grid=(n_blocks,),
        in_specs=[
            pl.BlockSpec((tm_eff, LANES), lambda i: (i, 0)),
            pl.BlockSpec((tm_eff, LANES), lambda i: (i, 0)),
        ],
        out_specs=pl.BlockSpec((1, 8, LANES), lambda i: (i, 0, 0)),
        compiler_params=pltpu.CompilerParams(
            # No cross-step dependence -> megacore can shard across TCs (v7x).
            dimension_semantics=("parallel",),
        ),
    )(p2, t2)

    # Tiny JAX epilogue: cross-block + cross-lane reduce, mean over the TRUE
    # element count, then sqrt.
    # TODO(synk): for counts > 2^24 the f32 representation of `total` (and the
    # mean) is slightly inexact; acceptable for standard RMSE-loss use.
    return jnp.sqrt(jnp.sum(partials) / jnp.float32(total))


if __name__ == "__main__":
    key = jax.random.PRNGKey(0)
    kp, kt = jax.random.split(key)

    # Small NCHW-like shape consistent with the module's typical usage.
    shape = (2, 4, 16, 16)
    predictions = jax.random.normal(kp, shape, dtype=jnp.float32)
    targets = jax.random.normal(kt, shape, dtype=jnp.float32)

    loss = rmse_pallas(predictions, targets)
    jax.block_until_ready(loss)
    ref = jnp.sqrt(jnp.mean((predictions - targets) ** 2))
    assert jnp.allclose(loss, ref, rtol=1e-5, atol=1e-6), (loss, ref)

    # Ragged element count (exercises the zero-pad tail path).
    kp2, kt2 = jax.random.split(jax.random.PRNGKey(1))
    shape2 = (3, 5, 7)  # 105 elements, not a multiple of 128
    p_r = jax.random.normal(kp2, shape2, dtype=jnp.float32)
    t_r = jax.random.normal(kt2, shape2, dtype=jnp.float32)
    loss_r = rmse_pallas(p_r, t_r)
    ref_r = jnp.sqrt(jnp.mean((p_r - t_r) ** 2))
    assert jnp.allclose(loss_r, ref_r, rtol=1e-5, atol=1e-6), (loss_r, ref_r)

    # Multi-block grid with a masked (partially out-of-bounds) final block.
    kp3, kt3 = jax.random.split(jax.random.PRNGKey(2))
    shape3 = (5, 32, 32)  # 5120 elements -> 40 rows; tm=16 -> 3 blocks, last masked
    p_m = jax.random.normal(kp3, shape3, dtype=jnp.float32)
    t_m = jax.random.normal(kt3, shape3, dtype=jnp.float32)
    loss_m = rmse_pallas(p_m, t_m, tm=16)
    ref_m = jnp.sqrt(jnp.mean((p_m - t_m) ** 2))
    assert jnp.allclose(loss_m, ref_m, rtol=1e-5, atol=1e-6), (loss_m, ref_m)

    # bf16 inputs stream in native dtype and are upcast inside the kernel.
    p_b = jax.random.normal(kp, (4, 8, 32), dtype=jnp.bfloat16)
    t_b = jax.random.normal(kt, (4, 8, 32), dtype=jnp.bfloat16)
    loss_b = rmse_pallas(p_b, t_b)
    ref_b = jnp.sqrt(jnp.mean((p_b.astype(jnp.float32) - t_b.astype(jnp.float32)) ** 2))
    assert jnp.allclose(loss_b, ref_b, rtol=1e-5, atol=1e-5), (loss_b, ref_b)

    print("KERNEL_OK")
</pallas_src>

<mosaic_0001>
module attributes {stable_mosaic.version = 11 : i64} {
  func.func @kernel(%arg0: i32, %arg1: memref<16x128xf32, #tpu.memory_space<vmem>>, %arg2: memref<16x128xf32, #tpu.memory_space<vmem>>, %arg3: memref<1x8x128xf32, #tpu.memory_space<vmem>>) attributes {dimension_semantics = [#tpu.dimension_semantics<parallel>], iteration_bounds = array<i64: 1>, scalar_prefetch = 0 : i64, scratch_operands = 0 : i64, tpu.core_type = #tpu.core_type<tc>, window_params = [{transform_indices = @transform_0, window_bounds = array<i64: 16, 128>}, {transform_indices = @transform_1, window_bounds = array<i64: 16, 128>}, {transform_indices = @transform_2, window_bounds = array<i64: 1, 8, 128>}]} {
    %c0 = arith.constant 0 : index
    %c0_0 = arith.constant 0 : index
    %0 = vector.load %arg1[%c0, %c0_0] : memref<16x128xf32, #tpu.memory_space<vmem>>, vector<16x128xf32>
    %c0_1 = arith.constant 0 : index
    %c0_2 = arith.constant 0 : index
    %1 = vector.load %arg2[%c0_1, %c0_2] : memref<16x128xf32, #tpu.memory_space<vmem>>, vector<16x128xf32>
    %2 = arith.subf %0, %1 : vector<16x128xf32>
    %3 = arith.mulf %2, %2 : vector<16x128xf32>
    %4 = vector.shape_cast %3 : vector<16x128xf32> to vector<2x8x128xf32>
    %cst = arith.constant dense<0.000000e+00> : vector<8x128xf32>
    %5 = vector.multi_reduction <add>, %4, %cst [0] : vector<2x8x128xf32> to vector<8x128xf32>
    %6 = vector.shape_cast %5 : vector<8x128xf32> to vector<1x8x128xf32>
    %c0_3 = arith.constant 0 : index
    %c0_4 = arith.constant 0 : index
    %c0_5 = arith.constant 0 : index
    %7 = vector.load %arg3[%c0_3, %c0_4, %c0_5] : memref<1x8x128xf32, #tpu.memory_space<vmem>>, vector<1x8x128xf32>
    tpu.vector_store %arg3[%c0_3, %c0_4, %c0_5], %6 {strides = array<i32>} : memref<1x8x128xf32, #tpu.memory_space<vmem>>, vector<1x8x128xf32>,
    return
  }
  func.func @transform_0(%arg0: i32) -> (i32, i32) {
    %c0_i32 = arith.constant 0 : i32
    %c0_i32_0 = arith.constant 0 : i32
    return %arg0, %c0_i32 : i32, i32
  }
  func.func @transform_1(%arg0: i32) -> (i32, i32) {
    %c0_i32 = arith.constant 0 : i32
    %c0_i32_0 = arith.constant 0 : i32
    return %arg0, %c0_i32 : i32, i32
  }
  func.func @transform_2(%arg0: i32) -> (i32, i32, i32) {
    %c0_i32 = arith.constant 0 : i32
    %c0_i32_0 = arith.constant 0 : i32
    %c0_i32_1 = arith.constant 0 : i32
    return %arg0, %c0_i32, %c0_i32_0 : i32, i32, i32
  }
}

</mosaic_0001>

<llo_original>
// kernel: tpu_custom_call.1
$region0: #{tpu_custom_call.1}
  #allocation0 [shape = 'u32[]', space=smem, size = 0x4, offset = 0x4, fixed_abs, tag = 'smem constant byte address 0x4 - core index']
  #allocation1 [shape = 'u32[144,128]{1,0:T(1,128)}', space=vmem, size = 0x12000, scoped, tag = 'internal scratch']
  %s0 = inlined_call_operand.hbm [shape: f32[16,128], index: 0, kind: input, shape index: {}]
  %s1 = inlined_call_operand.hbm [shape: f32[16,128], index: 1, kind: input, shape index: {}]
  %s2 = inlined_call_operand.hbm [shape: f32[1,8,128], index: 2, kind: output, shape index: {}]
  %s3 = sld [smem:[#allocation0]]
  $region26: #{tpu_custom_call.1} parent=0
    _
  %s5 = ssub.s32 1, %s3
  %s6 = scalar_select 0, %s5, %s3
  $region1: #{tpu_custom_call.1} parent=0
    #allocation2 [shape = 'u8[8192]{0}', space=vmem, size = 0x2000, scoped, tag = 'input window, operand 0, single buffered']
    #allocation3 [shape = 's32[1]{0}', space=sflag, size = 0x4, scoped, tag = 'scoped memory for tpu_custom_call.1']
    #allocation4 [shape = 's32[1]{0}', space=sflag, size = 0x4, scoped, tag = 'scoped memory for tpu_custom_call.1']
    #allocation5 [shape = 'u8[8192]{0}', space=vmem, size = 0x2000, scoped, tag = 'input window, operand 1, single buffered']
    #allocation6 [shape = 's32[1]{0}', space=sflag, size = 0x4, scoped, tag = 'scoped memory for tpu_custom_call.1']
    #allocation7 [shape = 'u8[4096]{0}', space=vmem, size = 0x1000, scoped, tag = 'output window, operand 0, single buffered']
    %7 = vsyncpa [#allocation3], 0
    %8 = vsyncpa [#allocation6], 0
    %9 = vsyncpa [#allocation4], 0
    // Predicated region
    $region2: #{tpu_custom_call.1} parent=1 // pred_check
      _
    $region3: #{tpu_custom_call.1} parent=1 // pred_check_branch
      %11 = sbr.rel (0) target = $region5
    $region4: #{tpu_custom_call.1} parent=1 // pred_region
      %s13 = ssub.s32 256, 256
      %14 = vsyncadd [#allocation3], %s13
      %s15 = sshll.u32 [#allocation2], 4
      %s16 = int_to_ptr.vmem [resolvable:$true] %s15
      %21 = dma.hbm_to_vmem [thread:$0]  %s0, 256, %s16, [#allocation3], 128, 128, 8
    $region5: #{tpu_custom_call.1} parent=1 // pred_fallthru
      _
    // Predicated region
    $region6: #{tpu_custom_call.1} parent=1 // pred_check
      _
    $region7: #{tpu_custom_call.1} parent=1 // pred_check_branch
      %23 = sbr.rel (0) target = $region9
    $region8: #{tpu_custom_call.1} parent=1 // pred_region
      %s25 = ssub.s32 256, 256
      %26 = vsyncadd [#allocation6], %s25
      %s27 = sshll.u32 [#allocation5], 4
      %s28 = int_to_ptr.vmem [resolvable:$true] %s27
      %33 = dma.hbm_to_vmem [thread:$0]  %s1, 256, %s28, [#allocation6], 128, 128, 8
    $region9: #{tpu_custom_call.1} parent=1 // pred_fallthru
      _
    // Predicated region
    $region10: #{tpu_custom_call.1} parent=1 // pred_check
      _
    $region11: #{tpu_custom_call.1} parent=1 // pred_check_branch
      %35 = sbr.rel (0) target = $region13
    $region12: #{tpu_custom_call.1} parent=1 // pred_region
      %36 = dma.done [#allocation3], 256
    $region13: #{tpu_custom_call.1} parent=1 // pred_fallthru
      _
    // Predicated region
    $region14: #{tpu_custom_call.1} parent=1 // pred_check
      _
    $region15: #{tpu_custom_call.1} parent=1 // pred_check_branch
      %38 = sbr.rel (0) target = $region17
    $region16: #{tpu_custom_call.1} parent=1 // pred_region
      %39 = dma.done [#allocation6], 256
    $region17: #{tpu_custom_call.1} parent=1 // pred_fallthru
      _
    %v40 = vld [vmem:[#allocation2] sm:$0xff]
    %v41 = vld [vmem:[#allocation2 + $0x8] sm:$0xff]
    %v42 = vld [vmem:[#allocation5] sm:$0xff]
    %v43 = vld [vmem:[#allocation5 + $0x8] sm:$0xff]
    %v44 = vsub.f32 %v40, %v42
    %v45 = vsub.f32 %v41, %v43
    %v46 = vmul.f32 %v44, %v44
    %v47 = vmul.f32 %v45, %v45
    %v48 = vadd.f32 %v46, %v47
    %49 = vst [vmem:[#allocation7] sm:$0xff] %v48
    // Predicated region
    $region18: #{tpu_custom_call.1} parent=1 // pred_check
      _
    $region19: #{tpu_custom_call.1} parent=1 // pred_check_branch
      %51 = sbr.rel (0) target = $region21
    $region20: #{tpu_custom_call.1} parent=1 // pred_region
      %s53 = ssub.s32 128, 128
      %54 = vsyncadd [#allocation4], %s53
      %s56 = sshll.u32 [#allocation7], 4
      %s57 = int_to_ptr.vmem [resolvable:$true] %s56
      %59 = dma.vmem_to_hbm [thread:$0]  %s57, 128, %s2, [#allocation4]
    $region21: #{tpu_custom_call.1} parent=1 // pred_fallthru
      _
    // Predicated region
    $region22: #{tpu_custom_call.1} parent=1 // pred_check
      _
    $region23: #{tpu_custom_call.1} parent=1 // pred_check_branch
      %61 = sbr.rel (0) target = $region25
    $region24: #{tpu_custom_call.1} parent=1 // pred_region
      %62 = dma.done [#allocation4], 128
    $region25: #{tpu_custom_call.1} parent=1 // pred_fallthru
      _
    %63 = vsyncpa [#allocation3], 1
    %64 = vsyncpa [#allocation6], 1
    %65 = vsyncpa [#allocation4], 1

</llo_original>
